<compile_context>
chip_gen: v7x
topology: tpu7x:2x2x1
jax: 0.10.0
libtpu: 0.0.40
codegen_flags: <defaults>
</compile_context>

<pallas_src>
import functools

import jax
import jax.numpy as jnp
from jax.experimental import pallas as pl
from jax.experimental.pallas import tpu as pltpu

BN_EPS = 1e-5
HP = 128          # padded hidden / output lane width (lane-dense tiles)


def _round_up(n, m):
    return ((n + m - 1) // m) * m


def mlp_kernel(a_ref, ws_ref, bias_ref, bn_ref, o_ref):
    """Fused fc2..fc7 forward on one (tile_b, HP) batch tile.

    a_ref    : (tile_b, HP) bf16  relu(fc1(x)) tile (padded lanes are zero)
    ws_ref   : (6, HP, HP)  bf16  fc2..fc7 weights stacked (resident)
    bias_ref : (8, HP)      f32   rows 0..5 = b2..b7 (resident, static)
    bn_ref   : (8, HP)      f32   row 0 = bn_scale, row 1 = bn_shift (resident)
    o_ref    : (tile_b, HP) bf16  lane-dense output tile
    """
    bias = bias_ref[...]                                   # single read, reused
    b2, b3, b4, b5, b6, b7 = (bias[i:i + 1, :] for i in range(6))
    bn = bn_ref[...]
    bn_scale = bn[0:1, :]
    bn_shift = bn[1:2, :]

    def lin_i(v_f32, i, b_f32):
        # MXU matmul in bf16 with f32 accumulation; elementwise math stays f32.
        return jnp.dot(v_f32.astype(jnp.bfloat16), ws_ref[i],
                       preferred_element_type=jnp.float32) + b_f32

    # bn1 applied to relu(fc1) (per-batch stats folded into scale/shift)
    x0 = a_ref[...].astype(jnp.float32) * bn_scale + bn_shift

    # fc2 + residual relu (act2)
    x1 = x0 + jnp.maximum(lin_i(x0, 0, b2), 0.0)
    # fc3 -> relu (act3) -> residual fc4
    x0 = lin_i(x1, 1, b3)
    x1 = x0 + lin_i(jnp.maximum(x0, 0.0), 2, b4)
    # act4 = relu, fc5, residual relu (act5)
    x0 = jnp.maximum(x1, 0.0)
    x1 = x0 + jnp.maximum(lin_i(x0, 3, b5), 0.0)
    # fc6 -> sigmoid (act6) -> fc7
    x0 = lin_i(x1, 4, b6)
    x1 = jax.nn.sigmoid(x0)
    o_ref[...] = lin_i(x1, 5, b7).astype(o_ref.dtype)


def prepare_params(params):
    """One-time packing of weights/biases into kernel-ready, 128-lane slabs."""
    input_dim, hidden = params["w1"].shape
    output_dim = params["w7"].shape[1]
    out_dims = [hidden] * 5 + [output_dim]

    # fc1 weight/bias padded to 128 output lanes -> the XLA pre-pass matmul
    # produces a lane-dense activation directly (no standalone pad pass).
    w1p = jnp.zeros((input_dim, HP), jnp.bfloat16).at[:, :hidden].set(
        params["w1"].astype(jnp.bfloat16))
    b1p = jnp.zeros((1, HP), jnp.float32).at[:, :hidden].set(params["b1"])

    # fc2..fc7 weights packed into a single resident bf16 slab (1 DMA).
    wstack = jnp.zeros((6, HP, HP), jnp.bfloat16)
    for i, od in enumerate(out_dims):
        wstack = wstack.at[i, :hidden, :od].set(
            params[f"w{i + 2}"].astype(jnp.bfloat16))

    # fc2..fc7 biases packed into a single resident f32 slab.
    bias = jnp.zeros((8, HP), jnp.float32)
    for i, od in enumerate(out_dims):
        bias = bias.at[i, :od].set(params[f"b{i + 2}"][0])

    bn_g = jnp.zeros((1, HP), jnp.float32).at[:, :hidden].set(params["bn_g"])
    bn_b = jnp.zeros((1, HP), jnp.float32).at[:, :hidden].set(params["bn_b"])

    return {"w1p": w1p, "b1p": b1p, "wstack": wstack, "bias": bias,
            "bn_g": bn_g, "bn_b": bn_b}


@functools.partial(jax.jit, static_argnames=("output_dim", "tile_b_max"))
def linear_regression_forward(x, packed, *, output_dim, tile_b_max=1024):
    """x: (batch, input_dim) f32. packed: output of prepare_params."""
    batch = x.shape[0]

    # ---- fc1 + relu pre-pass (single pass over x, also yields BN stats) ----
    # Training-mode BatchNorm1d needs full-batch statistics, so they are
    # computed here before the batch is tiled.  The same activation feeds the
    # kernel, so fc1 is computed exactly once.
    h1 = jnp.dot(x.astype(jnp.bfloat16), packed["w1p"],
                 preferred_element_type=jnp.float32) + packed["b1p"]
    a1 = jnp.maximum(h1, 0.0)                                  # (batch, HP) f32
    mean = jnp.mean(a1, axis=0, keepdims=True)
    var = jnp.mean(jnp.square(a1 - mean), axis=0, keepdims=True)   # biased var
    inv_std = jax.lax.rsqrt(var + BN_EPS)
    bn_scale = packed["bn_g"] * inv_std                        # (1, HP)
    bn_shift = packed["bn_b"] - mean * bn_scale                # (1, HP)
    bn_slab = jnp.zeros((8, HP), jnp.float32)
    bn_slab = bn_slab.at[0, :].set(bn_scale[0]).at[1, :].set(bn_shift[0])
    # TODO(synk): running_mean/running_var buffer updates (track_running_stats)
    # are a training-time side effect and are not materialized here.

    a1_bf = a1.astype(jnp.bfloat16)

    # ---- batch tiling: >=2 grid steps when possible (v7x megacore), big tiles
    b8 = _round_up(batch, 8)
    tile_b = min(tile_b_max, _round_up(pl.cdiv(b8, 2), 8))
    padded_b = _round_up(batch, tile_b)
    if padded_b != batch:
        a1_bf = jnp.pad(a1_bf, ((0, padded_b - batch), (0, 0)))

    grid = (padded_b // tile_b,)
    out = pl.pallas_call(
        mlp_kernel,
        out_shape=jax.ShapeDtypeStruct((padded_b, HP), jnp.bfloat16),
        grid=grid,
        in_specs=[
            pl.BlockSpec((tile_b, HP), lambda b: (b, 0)),    # a1: tiled over batch
            pl.BlockSpec((6, HP, HP), lambda b: (0, 0, 0)),  # fc2..fc7 weights: resident
            pl.BlockSpec((8, HP), lambda b: (0, 0)),         # biases: resident
            pl.BlockSpec((8, HP), lambda b: (0, 0)),         # BN scale/shift: resident
        ],
        out_specs=pl.BlockSpec((tile_b, HP), lambda b: (b, 0)),
        compiler_params=pltpu.CompilerParams(
            dimension_semantics=("parallel",)),              # shard batch on v7x TCs
    )(a1_bf, packed["wstack"], packed["bias"], bn_slab)

    return out[:batch, :output_dim].astype(jnp.float32)


def init_params(key, input_dim, output_dim, hidden=64):
    """Deterministic init mimicking nn.Linear's uniform(-1/sqrt(fan_in), +)."""
    dims = [input_dim] + [hidden] * 6 + [output_dim]
    params = {}
    for i in range(7):
        fan_in, fan_out = dims[i], dims[i + 1]
        key, kw, kb = jax.random.split(key, 3)
        bound = 1.0 / jnp.sqrt(float(fan_in))
        params[f"w{i + 1}"] = jax.random.uniform(
            kw, (fan_in, fan_out), jnp.float32, -bound, bound)
        params[f"b{i + 1}"] = jax.random.uniform(
            kb, (1, fan_out), jnp.float32, -bound, bound)
    params["bn_g"] = jnp.ones((1, hidden), jnp.float32)    # BatchNorm1d defaults
    params["bn_b"] = jnp.zeros((1, hidden), jnp.float32)
    return params


def reference_forward(x, p):
    """Pure-JAX reference mirroring the PyTorch forward (training-mode BN),
    with the same bf16-matmul / f32-accumulation precision as the kernel."""
    bf = jnp.bfloat16
    lin = lambda v, w, b: jnp.dot(
        v.astype(bf), w.astype(bf), preferred_element_type=jnp.float32) + b
    h = lin(x, p["w1"], p["b1"])
    a = jnp.maximum(h, 0.0)
    mean = a.mean(0, keepdims=True)
    var = jnp.square(a - mean).mean(0, keepdims=True)
    x0 = (a - mean) * jax.lax.rsqrt(var + BN_EPS) * p["bn_g"] + p["bn_b"]
    x1 = x0 + jnp.maximum(lin(x0, p["w2"], p["b2"]), 0.0)
    x0 = lin(x1, p["w3"], p["b3"])
    x1 = x0 + lin(jnp.maximum(x0, 0.0), p["w4"], p["b4"])
    x0 = jnp.maximum(x1, 0.0)
    x1 = x0 + jnp.maximum(lin(x0, p["w5"], p["b5"]), 0.0)
    x0 = lin(x1, p["w6"], p["b6"])
    return lin(jax.nn.sigmoid(x0), p["w7"], p["b7"])


if __name__ == "__main__":
    INPUT_DIM, OUTPUT_DIM, BATCH = 32, 8, 16

    key = jax.random.PRNGKey(0)
    key, kx = jax.random.split(key)
    x = jax.random.normal(kx, (BATCH, INPUT_DIM), jnp.float32)
    params = init_params(key, INPUT_DIM, OUTPUT_DIM)
    packed = jax.block_until_ready(prepare_params(params))   # one-time packing

    out = jax.block_until_ready(
        linear_regression_forward(x, packed, output_dim=OUTPUT_DIM))
    ref = jax.block_until_ready(reference_forward(x, params))

    assert out.shape == (BATCH, OUTPUT_DIM), out.shape
    max_err = float(jnp.max(jnp.abs(out - ref)))
    assert jnp.allclose(out, ref, atol=1e-2, rtol=1e-2), f"max abs err {max_err}"
    print("KERNEL_OK")
</pallas_src>

<mosaic_0001>
module attributes {stable_mosaic.version = 11 : i64} {
  func.func @mlp_kernel(%arg0: i32, %arg1: memref<8x128xbf16, #tpu.memory_space<vmem>>, %arg2: memref<6x128x128xbf16, #tpu.memory_space<vmem>>, %arg3: memref<8x128xf32, #tpu.memory_space<vmem>>, %arg4: memref<8x128xf32, #tpu.memory_space<vmem>>, %arg5: memref<8x128xbf16, #tpu.memory_space<vmem>>) attributes {dimension_semantics = [#tpu.dimension_semantics<parallel>], iteration_bounds = array<i64: 2>, scalar_prefetch = 0 : i64, scratch_operands = 0 : i64, tpu.core_type = #tpu.core_type<tc>, window_params = [{transform_indices = @transform_0, window_bounds = array<i64: 8, 128>}, {pipeline_mode = #tpu.pipeline_mode<synchronous>, transform_indices = @transform_1, window_bounds = array<i64: 6, 128, 128>}, {pipeline_mode = #tpu.pipeline_mode<synchronous>, transform_indices = @transform_2, window_bounds = array<i64: 8, 128>}, {pipeline_mode = #tpu.pipeline_mode<synchronous>, transform_indices = @transform_3, window_bounds = array<i64: 8, 128>}, {transform_indices = @transform_4, window_bounds = array<i64: 8, 128>}]} {
    %c0 = arith.constant 0 : index
    %c0_0 = arith.constant 0 : index
    %0 = vector.load %arg3[%c0, %c0_0] : memref<8x128xf32, #tpu.memory_space<vmem>>, vector<8x128xf32>
    %1 = vector.extract_strided_slice %0 {offsets = [0, 0], sizes = [1, 128], strides = [1, 1]} : vector<8x128xf32> to vector<1x128xf32>
    %2 = vector.extract_strided_slice %0 {offsets = [1, 0], sizes = [1, 128], strides = [1, 1]} : vector<8x128xf32> to vector<1x128xf32>
    %3 = vector.extract_strided_slice %0 {offsets = [2, 0], sizes = [1, 128], strides = [1, 1]} : vector<8x128xf32> to vector<1x128xf32>
    %4 = vector.extract_strided_slice %0 {offsets = [3, 0], sizes = [1, 128], strides = [1, 1]} : vector<8x128xf32> to vector<1x128xf32>
    %5 = vector.extract_strided_slice %0 {offsets = [4, 0], sizes = [1, 128], strides = [1, 1]} : vector<8x128xf32> to vector<1x128xf32>
    %6 = vector.extract_strided_slice %0 {offsets = [5, 0], sizes = [1, 128], strides = [1, 1]} : vector<8x128xf32> to vector<1x128xf32>
    %c0_1 = arith.constant 0 : index
    %c0_2 = arith.constant 0 : index
    %7 = vector.load %arg4[%c0_1, %c0_2] : memref<8x128xf32, #tpu.memory_space<vmem>>, vector<8x128xf32>
    %8 = vector.extract_strided_slice %7 {offsets = [0, 0], sizes = [1, 128], strides = [1, 1]} : vector<8x128xf32> to vector<1x128xf32>
    %9 = vector.extract_strided_slice %7 {offsets = [1, 0], sizes = [1, 128], strides = [1, 1]} : vector<8x128xf32> to vector<1x128xf32>
    %c0_3 = arith.constant 0 : index
    %c0_4 = arith.constant 0 : index
    %10 = vector.load %arg1[%c0_3, %c0_4] : memref<8x128xbf16, #tpu.memory_space<vmem>>, vector<8x128xbf16>
    %11 = arith.extf %10 : vector<8x128xbf16> to vector<8x128xf32>
    %12 = vector.broadcast %8 : vector<1x128xf32> to vector<8x128xf32>
    %13 = arith.mulf %11, %12 : vector<8x128xf32>
    %14 = vector.broadcast %9 : vector<1x128xf32> to vector<8x128xf32>
    %15 = arith.addf %13, %14 : vector<8x128xf32>
    %16 = arith.truncf %15 : vector<8x128xf32> to vector<8x128xbf16>
    %c0_5 = arith.constant 0 : index
    %c0_6 = arith.constant 0 : index
    %c0_7 = arith.constant 0 : index
    %17 = vector.load %arg2[%c0_5, %c0_6, %c0_7] : memref<6x128x128xbf16, #tpu.memory_space<vmem>>, vector<1x128x128xbf16>
    %18 = vector.shape_cast %17 : vector<1x128x128xbf16> to vector<128x128xbf16>
    %cst = arith.constant dense<0.000000e+00> : vector<8x128xf32>
    %19 = tpu.matmul %16, %18, %cst {dimension_numbers = #tpu.dot_dimension_numbers<[1], [0], [0], [1], [0, 0, 1, 1], [], []>} : vector<8x128xbf16>, vector<128x128xbf16>, vector<8x128xf32> -> vector<8x128xf32>
    %20 = vector.broadcast %1 : vector<1x128xf32> to vector<8x128xf32>
    %21 = arith.addf %19, %20 : vector<8x128xf32>
    %cst_8 = arith.constant 0.000000e+00 : f32
    %22 = vector.broadcast %cst_8 : f32 to vector<8x128xf32>
    %23 = arith.maximumf %21, %22 : vector<8x128xf32>
    %24 = arith.addf %15, %23 : vector<8x128xf32>
    %25 = arith.truncf %24 : vector<8x128xf32> to vector<8x128xbf16>
    %c1 = arith.constant 1 : index
    %c0_9 = arith.constant 0 : index
    %c0_10 = arith.constant 0 : index
    %26 = vector.load %arg2[%c1, %c0_9, %c0_10] : memref<6x128x128xbf16, #tpu.memory_space<vmem>>, vector<1x128x128xbf16>
    %27 = vector.shape_cast %26 : vector<1x128x128xbf16> to vector<128x128xbf16>
    %cst_11 = arith.constant dense<0.000000e+00> : vector<8x128xf32>
    %28 = tpu.matmul %25, %27, %cst_11 {dimension_numbers = #tpu.dot_dimension_numbers<[1], [0], [0], [1], [0, 0, 1, 1], [], []>} : vector<8x128xbf16>, vector<128x128xbf16>, vector<8x128xf32> -> vector<8x128xf32>
    %29 = vector.broadcast %2 : vector<1x128xf32> to vector<8x128xf32>
    %30 = arith.addf %28, %29 : vector<8x128xf32>
    %cst_12 = arith.constant 0.000000e+00 : f32
    %31 = vector.broadcast %cst_12 : f32 to vector<8x128xf32>
    %32 = arith.maximumf %30, %31 : vector<8x128xf32>
    %33 = arith.truncf %32 : vector<8x128xf32> to vector<8x128xbf16>
    %c2 = arith.constant 2 : index
    %c0_13 = arith.constant 0 : index
    %c0_14 = arith.constant 0 : index
    %34 = vector.load %arg2[%c2, %c0_13, %c0_14] : memref<6x128x128xbf16, #tpu.memory_space<vmem>>, vector<1x128x128xbf16>
    %35 = vector.shape_cast %34 : vector<1x128x128xbf16> to vector<128x128xbf16>
    %cst_15 = arith.constant dense<0.000000e+00> : vector<8x128xf32>
    %36 = tpu.matmul %33, %35, %cst_15 {dimension_numbers = #tpu.dot_dimension_numbers<[1], [0], [0], [1], [0, 0, 1, 1], [], []>} : vector<8x128xbf16>, vector<128x128xbf16>, vector<8x128xf32> -> vector<8x128xf32>
    %37 = vector.broadcast %3 : vector<1x128xf32> to vector<8x128xf32>
    %38 = arith.addf %36, %37 : vector<8x128xf32>
    %39 = arith.addf %30, %38 : vector<8x128xf32>
    %cst_16 = arith.constant 0.000000e+00 : f32
    %40 = vector.broadcast %cst_16 : f32 to vector<8x128xf32>
    %41 = arith.maximumf %39, %40 : vector<8x128xf32>
    %42 = arith.truncf %41 : vector<8x128xf32> to vector<8x128xbf16>
    %c3 = arith.constant 3 : index
    %c0_17 = arith.constant 0 : index
    %c0_18 = arith.constant 0 : index
    %43 = vector.load %arg2[%c3, %c0_17, %c0_18] : memref<6x128x128xbf16, #tpu.memory_space<vmem>>, vector<1x128x128xbf16>
    %44 = vector.shape_cast %43 : vector<1x128x128xbf16> to vector<128x128xbf16>
    %cst_19 = arith.constant dense<0.000000e+00> : vector<8x128xf32>
    %45 = tpu.matmul %42, %44, %cst_19 {dimension_numbers = #tpu.dot_dimension_numbers<[1], [0], [0], [1], [0, 0, 1, 1], [], []>} : vector<8x128xbf16>, vector<128x128xbf16>, vector<8x128xf32> -> vector<8x128xf32>
    %46 = vector.broadcast %4 : vector<1x128xf32> to vector<8x128xf32>
    %47 = arith.addf %45, %46 : vector<8x128xf32>
    %cst_20 = arith.constant 0.000000e+00 : f32
    %48 = vector.broadcast %cst_20 : f32 to vector<8x128xf32>
    %49 = arith.maximumf %47, %48 : vector<8x128xf32>
    %50 = arith.addf %41, %49 : vector<8x128xf32>
    %51 = arith.truncf %50 : vector<8x128xf32> to vector<8x128xbf16>
    %c4 = arith.constant 4 : index
    %c0_21 = arith.constant 0 : index
    %c0_22 = arith.constant 0 : index
    %52 = vector.load %arg2[%c4, %c0_21, %c0_22] : memref<6x128x128xbf16, #tpu.memory_space<vmem>>, vector<1x128x128xbf16>
    %53 = vector.shape_cast %52 : vector<1x128x128xbf16> to vector<128x128xbf16>
    %cst_23 = arith.constant dense<0.000000e+00> : vector<8x128xf32>
    %54 = tpu.matmul %51, %53, %cst_23 {dimension_numbers = #tpu.dot_dimension_numbers<[1], [0], [0], [1], [0, 0, 1, 1], [], []>} : vector<8x128xbf16>, vector<128x128xbf16>, vector<8x128xf32> -> vector<8x128xf32>
    %55 = vector.broadcast %5 : vector<1x128xf32> to vector<8x128xf32>
    %56 = arith.addf %54, %55 : vector<8x128xf32>
    %57 = arith.negf %56 : vector<8x128xf32>
    %58 = math.exp %57 : vector<8x128xf32>
    %cst_24 = arith.constant 1.000000e+00 : f32
    %59 = vector.broadcast %cst_24 : f32 to vector<8x128xf32>
    %60 = arith.addf %59, %58 : vector<8x128xf32>
    %61 = arith.divf %59, %60 : vector<8x128xf32>
    %62 = arith.truncf %61 : vector<8x128xf32> to vector<8x128xbf16>
    %c5 = arith.constant 5 : index
    %c0_25 = arith.constant 0 : index
    %c0_26 = arith.constant 0 : index
    %63 = vector.load %arg2[%c5, %c0_25, %c0_26] : memref<6x128x128xbf16, #tpu.memory_space<vmem>>, vector<1x128x128xbf16>
    %64 = vector.shape_cast %63 : vector<1x128x128xbf16> to vector<128x128xbf16>
    %cst_27 = arith.constant dense<0.000000e+00> : vector<8x128xf32>
    %65 = tpu.matmul %62, %64, %cst_27 {dimension_numbers = #tpu.dot_dimension_numbers<[1], [0], [0], [1], [0, 0, 1, 1], [], []>} : vector<8x128xbf16>, vector<128x128xbf16>, vector<8x128xf32> -> vector<8x128xf32>
    %66 = vector.broadcast %6 : vector<1x128xf32> to vector<8x128xf32>
    %67 = arith.addf %65, %66 : vector<8x128xf32>
    %68 = arith.truncf %67 : vector<8x128xf32> to vector<8x128xbf16>
    %c0_28 = arith.constant 0 : index
    %c0_29 = arith.constant 0 : index
    %69 = vector.load %arg5[%c0_28, %c0_29] : memref<8x128xbf16, #tpu.memory_space<vmem>>, vector<8x128xbf16>
    tpu.vector_store %arg5[%c0_28, %c0_29], %68 {strides = array<i32>} : memref<8x128xbf16, #tpu.memory_space<vmem>>, vector<8x128xbf16>,
    return
  }
  func.func @transform_0(%arg0: i32) -> (i32, i32) {
    %c0_i32 = arith.constant 0 : i32
    %c0_i32_0 = arith.constant 0 : i32
    return %arg0, %c0_i32 : i32, i32
  }
  func.func @transform_1(%arg0: i32) -> (i32, i32, i32) {
    %c0_i32 = arith.constant 0 : i32
    %c0_i32_0 = arith.constant 0 : i32
    %c0_i32_1 = arith.constant 0 : i32
    %c0_i32_2 = arith.constant 0 : i32
    return %c0_i32, %c0_i32_0, %c0_i32_1 : i32, i32, i32
  }
  func.func @transform_2(%arg0: i32) -> (i32, i32) {
    %c0_i32 = arith.constant 0 : i32
    %c0_i32_0 = arith.constant 0 : i32
    %c0_i32_1 = arith.constant 0 : i32
    return %c0_i32, %c0_i32_0 : i32, i32
  }
  func.func @transform_3(%arg0: i32) -> (i32, i32) {
    %c0_i32 = arith.constant 0 : i32
    %c0_i32_0 = arith.constant 0 : i32
    %c0_i32_1 = arith.constant 0 : i32
    return %c0_i32, %c0_i32_0 : i32, i32
  }
  func.func @transform_4(%arg0: i32) -> (i32, i32) {
    %c0_i32 = arith.constant 0 : i32
    %c0_i32_0 = arith.constant 0 : i32
    return %arg0, %c0_i32 : i32, i32
  }
}

</mosaic_0001>

<llo_original>
// kernel: linear_regression_forward.1
$region0: #{linear_regression_forward.1}
  #allocation0 [shape = 'u32[]', space=smem, size = 0x4, offset = 0x4, fixed_abs, tag = 'smem constant byte address 0x4 - core index']
  #allocation1 [shape = 'u32[144,128]{1,0:T(1,128)}', space=vmem, size = 0x12000, scoped, tag = 'internal scratch']
  %s0 = inlined_call_operand.vmem [shape: bf16[16,128], index: 0, kind: input, shape index: {}]
  %s1 = inlined_call_operand.hbm [shape: bf16[6,128,128], index: 1, kind: input, shape index: {}]
  %s2 = inlined_call_operand.vmem [shape: f32[8,128], index: 2, kind: input, shape index: {}]
  %s3 = inlined_call_operand.vmem [shape: f32[8,128], index: 3, kind: input, shape index: {}]
  %s4 = inlined_call_operand.vmem [shape: bf16[16,128], index: 4, kind: output, shape index: {}]
  %s5 = sld [smem:[#allocation0]]
  $region53: #{linear_regression_forward.1} parent=0
    _
  %s7 = ssub.s32 1, %s5
  %s8 = scalar_select 0, %s7, %s5
  $region1: #{linear_regression_forward.1} parent=0
    #allocation2 [shape = 'u8[196608]{0}', space=vmem, size = 0x30000, scoped, tag = 'input window, operand 1, single buffered']
    #allocation3 [shape = 's32[2]{0}', space=sflag, size = 0x8, scoped, tag = 'scoped memory for linear_regression_forward.1']
    %9 = vsyncpa [#allocation3], 0
    loop: start=0, step=1, limit=4
    $region2: #{linear_regression_forward.1} parent=1 // loop_pre_header
      _
    $region3: #{linear_regression_forward.1} parent=1 // loop_header
      %s11 = sphi 0, %s15
      %p12 = scmp.ge.s32.totalorder %s11, 4
      %s21 = sphi 0, %s23
      %s24 = sphi 0, %s21
      %s25 = sphi 0, %s24
      %s41 = sphi 0, %s25
      %s45 = sphi 0, %s45
      %s47 = sphi 0, %s45
      %s48 = sphi 0, %s47
      %s62 = sphi 0, %s48
      %s66 = sphi 0, %s66
      %s68 = sphi 0, %s66
      %s69 = sphi 0, %s68
      %s83 = sphi 0, %s69
      %s87 = sphi 0, %s87
      %s89 = sphi 0, %s87
      %s90 = sphi 0, %s89
      %s104 = sphi 0, %s90
      %s110 = sphi 0, %s112
      %s113 = sphi 0, %s110
      %s114 = sphi 0, %s113
      %s130 = sphi 0, %s114
    $region4: #{linear_regression_forward.1} parent=1 // loop_header_branch
      %14 = sbr.rel (%p12) target = $region8
    $region5: #{linear_regression_forward.1} parent=1 // loop_body
      %s16 = ssub.s32 %s11, 1
      %s17 = ssub.s32 %s11, 2
      %s18 = sadd.s32 %s11, 1
      %s19 = ssub.s32 %s11, %s18
      %p20 = scmp.eq.s32.totalorder %s19, 0
      %s22 = sadd.s32 %s21, 1
      %s23 = scalar_select %p20, %s21, %s22
      %p26 = pneg %p20
      %p27 = scmp.eq.s32.totalorder %s11, 1
      %p28 = por %p26, %p27
      %p29 = scmp.ne.s32.totalorder %s21, %s24
      %p30 = scmp.eq.s32.totalorder %s11, 0
      %p31 = por %p29, %p30
      %p32 = scmp.ne.s32.totalorder %s21, %s24
      %p33 = scmp.eq.s32.totalorder %s16, 1
      %p34 = por %p32, %p33
      %p35 = scmp.ne.s32.totalorder %s24, %s25
      %p36 = scmp.eq.s32.totalorder %s16, 0
      %p37 = por %p35, %p36
      %p38 = scmp.ne.s32.totalorder %s24, %s25
      %p39 = scmp.eq.s32.totalorder %s17, 1
      %p40 = por %p38, %p39
      %p42 = scmp.ne.s32.totalorder %s25, %s41
      %p43 = scmp.eq.s32.totalorder %s17, 0
      %p44 = por %p42, %p43
      %s46 = sadd.s32 %s45, 1
      %p49 = scmp.eq.s32.totalorder %s11, 1
      %p50 = scmp.ne.s32.totalorder %s45, %s47
      %p51 = scmp.eq.s32.totalorder %s11, 0
      %p52 = por %p50, %p51
      %p53 = scmp.ne.s32.totalorder %s45, %s47
      %p54 = scmp.eq.s32.totalorder %s16, 1
      %p55 = por %p53, %p54
      %p56 = scmp.ne.s32.totalorder %s47, %s48
      %p57 = scmp.eq.s32.totalorder %s16, 0
      %p58 = por %p56, %p57
      %p59 = scmp.ne.s32.totalorder %s47, %s48
      %p60 = scmp.eq.s32.totalorder %s17, 1
      %p61 = por %p59, %p60
      %p63 = scmp.ne.s32.totalorder %s48, %s62
      %p64 = scmp.eq.s32.totalorder %s17, 0
      %p65 = por %p63, %p64
      %s67 = sadd.s32 %s66, 1
      %p70 = scmp.eq.s32.totalorder %s11, 1
      %p71 = scmp.ne.s32.totalorder %s66, %s68
      %p72 = scmp.eq.s32.totalorder %s11, 0
      %p73 = por %p71, %p72
      %p74 = scmp.ne.s32.totalorder %s66, %s68
      %p75 = scmp.eq.s32.totalorder %s16, 1
      %p76 = por %p74, %p75
      %p77 = scmp.ne.s32.totalorder %s68, %s69
      %p78 = scmp.eq.s32.totalorder %s16, 0
      %p79 = por %p77, %p78
      %p80 = scmp.ne.s32.totalorder %s68, %s69
      %p81 = scmp.eq.s32.totalorder %s17, 1
      %p82 = por %p80, %p81
      %p84 = scmp.ne.s32.totalorder %s69, %s83
      %p85 = scmp.eq.s32.totalorder %s17, 0
      %p86 = por %p84, %p85
      %s88 = sadd.s32 %s87, 1
      %p91 = scmp.eq.s32.totalorder %s11, 1
      %p92 = scmp.ne.s32.totalorder %s87, %s89
      %p93 = scmp.eq.s32.totalorder %s11, 0
      %p94 = por %p92, %p93
      %p95 = scmp.ne.s32.totalorder %s87, %s89
      %p96 = scmp.eq.s32.totalorder %s16, 1
      %p97 = por %p95, %p96
      %p98 = scmp.ne.s32.totalorder %s89, %s90
      %p99 = scmp.eq.s32.totalorder %s16, 0
      %p100 = por %p98, %p99
      %p101 = scmp.ne.s32.totalorder %s89, %s90
      %p102 = scmp.eq.s32.totalorder %s17, 1
      %p103 = por %p101, %p102
      %p105 = scmp.ne.s32.totalorder %s90, %s104
      %p106 = scmp.eq.s32.totalorder %s17, 0
      %p107 = por %p105, %p106
      %s108 = ssub.s32 %s11, %s18
      %p109 = scmp.eq.s32.totalorder %s108, 0
      %s111 = sadd.s32 %s110, 1
      %s112 = scalar_select %p109, %s110, %s111
      %p115 = pneg %p109
      %p116 = scmp.eq.s32.totalorder %s11, 1
      %p117 = por %p115, %p116
      %p118 = scmp.ne.s32.totalorder %s110, %s113
      %p119 = scmp.eq.s32.totalorder %s11, 0
      %p120 = por %p118, %p119
      %p121 = scmp.ne.s32.totalorder %s110, %s113
      %p122 = scmp.eq.s32.totalorder %s16, 1
      %p123 = por %p121, %p122
      %p124 = scmp.ne.s32.totalorder %s113, %s114
      %p125 = scmp.eq.s32.totalorder %s16, 0
      %p126 = por %p124, %p125
      %p127 = scmp.ne.s32.totalorder %s113, %s114
      %p128 = scmp.eq.s32.totalorder %s17, 1
      %p129 = por %p127, %p128
      %p131 = scmp.ne.s32.totalorder %s114, %s130
      %p132 = scmp.eq.s32.totalorder %s17, 0
      %p133 = por %p131, %p132
      %p134 = scmp.le.s32.totalorder 1, %s11
      %p135 = scmp.lt.s32.totalorder %s11, 3
      %p136 = pnand %p134, %p135
      %p137 = pneg %p136
      // Predicated region
      $region9: #{linear_regression_forward.1} parent=5 // pred_check
        _
      $region10: #{linear_regression_forward.1} parent=5 // pred_check_branch
        %139 = sbr.rel (%p136) target = $region12
      $region11: #{linear_regression_forward.1} parent=5 // pred_region
        %s140 = ssub.s32 %s11, 1
        // Predicated region
        $region13: #{linear_regression_forward.1} parent=11 // pred_check
          %p141 = pneg %p58
        $region14: #{linear_regression_forward.1} parent=11 // pred_check_branch
          %143 = sbr.rel (%p141) target = $region16
        $region15: #{linear_regression_forward.1} parent=11 // pred_region
          %s145 = ssub.s32 6144, 6144
          %146 = vsyncadd [#allocation3], %s145
          %s147 = sshll.u32 [#allocation2], 4
          %s148 = int_to_ptr.vmem [resolvable:$true] %s147
          %153 = dma.hbm_to_vmem [thread:$0]  %s1, 6144, %s148, [#allocation3], 64, 64, 4
        $region16: #{linear_regression_forward.1} parent=11 // pred_fallthru
          _
        // Predicated region
        $region17: #{linear_regression_forward.1} parent=11 // pred_check
          %p154 = pneg %p79
        $region18: #{linear_regression_forward.1} parent=11 // pred_check_branch
          %156 = sbr.rel (%p154) target = $region20
        $region19: #{linear_regression_forward.1} parent=11 // pred_region
          _
        $region20: #{linear_regression_forward.1} parent=11 // pred_fallthru
          _
        // Predicated region
        $region21: #{linear_regression_forward.1} parent=11 // pred_check
          %p157 = pneg %p100
        $region22: #{linear_regression_forward.1} parent=11 // pred_check_branch
          %159 = sbr.rel (%p157) target = $region24
        $region23: #{linear_regression_forward.1} parent=11 // pred_region
          _
        $region24: #{linear_regression_forward.1} parent=11 // pred_fallthru
          _
      $region12: #{linear_regression_forward.1} parent=5 // pred_fallthru
        _
      %p160 = scmp.lt.s32.totalorder %s11, 2
      // Predicated region
      $region25: #{linear_regression_forward.1} parent=5 // pred_check
        %p161 = pneg %p160
      $region26: #{linear_regression_forward.1} parent=5 // pred_check_branch
        %163 = sbr.rel (%p161) target = $region28
      $region27: #{linear_regression_forward.1} parent=5 // pred_region
        // Predicated region
        $region29: #{linear_regression_forward.1} parent=27 // pred_check
          %p164 = pneg %p31
        $region30: #{linear_regression_forward.1} parent=27 // pred_check_branch
          %166 = sbr.rel (%p164) target = $region32
        $region31: #{linear_regression_forward.1} parent=27 // pred_region
          %p167 = scmp.lt.s32.totalorder %s11, 1
          %s168 = scalar_select %p167, %s11, 1
          %s169 = smul.addr %s168, 4
          %s170 = scalar_lea.vmem %s0, %s169
        $region32: #{linear_regression_forward.1} parent=27 // pred_fallthru
          _
      $region28: #{linear_regression_forward.1} parent=5 // pred_fallthru
        _
      %p171 = scmp.le.s32.totalorder 1, %s11
      %p172 = scmp.lt.s32.totalorder %s11, 3
      %p173 = pnand %p171, %p172
      %p174 = pneg %p173
      // Predicated region
      $region33: #{linear_regression_forward.1} parent=5 // pred_check
        _
      $region34: #{linear_regression_forward.1} parent=5 // pred_check_branch
        %176 = sbr.rel (%p173) target = $region36
      $region35: #{linear_regression_forward.1} parent=5 // pred_region
        %s177 = ssub.s32 %s11, 1
        // Predicated region
        $region37: #{linear_regression_forward.1} parent=35 // pred_check
          %p178 = pneg %p58
        $region38: #{linear_regression_forward.1} parent=35 // pred_check_branch
          %180 = sbr.rel (%p178) target = $region40
        $region39: #{linear_regression_forward.1} parent=35 // pred_region
          %181 = dma.done [#allocation3], 6144
        $region40: #{linear_regression_forward.1} parent=35 // pred_fallthru
          _
        %p182 = scmp.lt.s32.totalorder %s16, 1
        %s183 = scalar_select %p182, %s16, 1
        %s184 = smul.addr %s183, 4
        %s185 = scalar_lea.vmem %s0, %s184
        %p186 = pneg %p37
        %p187 = pneg %p34
        %p188 = pneg %p58
        %p189 = pneg %p55
        %p190 = pneg %p79
        %p191 = pneg %p76
        %p192 = pneg %p100
        %p193 = pneg %p97
        %p194 = pneg %p126
        %p195 = pneg %p123
        %p196 = scmp.lt.s32.totalorder %s16, 1
        %s197 = scalar_select %p196, %s16, 1
        %s198 = smul.addr %s197, 4
        %s199 = scalar_lea.vmem %s4, %s198
        %p200 = scmp.lt.s32.totalorder %s16, 1
        %s201 = scalar_select %p200, %s16, 1
        %s202 = smul.addr %s201, 4
        %s203 = scalar_lea.vmem %s0, %s202
        %p204 = scmp.lt.s32.totalorder %s16, 1
        %s205 = scalar_select %p204, %s16, 1
        %s206 = smul.addr %s205, 4
        %s207 = scalar_lea.vmem %s4, %s206
        %v209 = vld [vmem:[%s2] sm:$0xff]
        %v210 = vld [vmem:[%s3] sm:$0xff]
        %v211 = vld [vmem:[%s203] sm:$0xf]
        %v212 = vunpack.c.l.bf16 %v211
        %v213 = vlaneseq
        %v214 = vshrl.u32 %v213, 7
        %v215 = vsub.s32 0, %v214
        %v216 = vrot.slane %v210, %v215
        %v217 = vmul.f32 %v212, %v216
        %v218 = vlaneseq
        %v219 = vshrl.u32 %v218, 7
        %v220 = vsub.s32 1, %v219
        %v221 = vrot.slane %v210, %v220
        %v222 = vadd.f32 %v217, %v221
        %v223 = vpack.c.bf16 %v222, %v222
        %v224 = vld [vmem:[#allocation2] sm:$0xf]
        %v225 = vld [vmem:[#allocation2 + $0x4] sm:$0xf]
        %v226 = vld [vmem:[#allocation2 + $0x8] sm:$0xf]
        %v227 = vld [vmem:[#allocation2 + $0xc] sm:$0xf]
        %v228 = vld [vmem:[#allocation2 + $0x10] sm:$0xf]
        %v229 = vld [vmem:[#allocation2 + $0x14] sm:$0xf]
        %v230 = vld [vmem:[#allocation2 + $0x18] sm:$0xf]
        %v231 = vld [vmem:[#allocation2 + $0x1c] sm:$0xf]
        %v232 = vld [vmem:[#allocation2 + $0x20] sm:$0xf]
        %v233 = vld [vmem:[#allocation2 + $0x24] sm:$0xf]
        %v234 = vld [vmem:[#allocation2 + $0x28] sm:$0xf]
        %v235 = vld [vmem:[#allocation2 + $0x2c] sm:$0xf]
        %v236 = vld [vmem:[#allocation2 + $0x30] sm:$0xf]
        %v237 = vld [vmem:[#allocation2 + $0x34] sm:$0xf]
        %v238 = vld [vmem:[#allocation2 + $0x38] sm:$0xf]
        %v239 = vld [vmem:[#allocation2 + $0x3c] sm:$0xf]
        %v240 = vlaneseq
        %v241 = vshrl.u32 %v240, 7
        %v242 = vsub.s32 0, %v241
        %v243 = vrot.slane %v209, %v242
        %v260 = vunpack.c.l.b16 %v224
        %v261 = vunpack.c.l.b16 %v225
        %v262 = vunpack.c.l.b16 %v226
        %v263 = vunpack.c.l.b16 %v227
        %v264 = vunpack.c.l.b16 %v228
        %v265 = vunpack.c.l.b16 %v229
        %v266 = vunpack.c.l.b16 %v230
        %v267 = vunpack.c.l.b16 %v231
        %v268 = vunpack.c.l.b16 %v232
        %v269 = vunpack.c.l.b16 %v233
        %v270 = vunpack.c.l.b16 %v234
        %v271 = vunpack.c.l.b16 %v235
        %v272 = vunpack.c.l.b16 %v236
        %v273 = vunpack.c.l.b16 %v237
        %v274 = vunpack.c.l.b16 %v238
        %v275 = vunpack.c.l.b16 %v239
        %v276 = vpack.c.b16 %v261, %v260
        %v277 = vpack.c.b16 %v263, %v262
        %v278 = vpack.c.b16 %v265, %v264
        %v279 = vpack.c.b16 %v267, %v266
        %v280 = vpack.c.b16 %v269, %v268
        %v281 = vpack.c.b16 %v271, %v270
        %v282 = vpack.c.b16 %v273, %v272
        %v283 = vpack.c.b16 %v275, %v274
        %292 = vmatprep.subr.bf16.mxu0 0
        %293 = vmatpush1.bf16.msra.mxu0 %v276
        %294 = vmatprep.subr.bf16.mxu0 0
        %295 = vmatpush1.bf16.msra.mxu0 %v277
        %296 = vmatprep.subr.bf16.mxu0 0
        %297 = vmatpush1.bf16.msra.mxu0 %v278
        %298 = vmatprep.subr.bf16.mxu0 0
        %299 = vmatpush1.bf16.msra.mxu0 %v279
        %300 = vmatprep.subr.bf16.mxu0 0
        %301 = vmatpush1.bf16.msra.mxu0 %v280
        %302 = vmatprep.subr.bf16.mxu0 0
        %303 = vmatpush1.bf16.msra.mxu0 %v281
        %304 = vmatprep.subr.bf16.mxu0 0
        %305 = vmatpush1.bf16.msra.mxu0 %v282
        %306 = vmatprep.subr.bf16.mxu0 0
        %307 = vmatpush1.bf16.msra.mxu0 %v283
        %308 = vmatprep.subr.bf16.mxu0 0
        %309 = vmatpush1.bf16.msra.mxu0 0
        %310 = vmatprep.subr.bf16.mxu0 0
        %311 = vmatpush1.bf16.msra.mxu0 0
        %312 = vmatprep.subr.bf16.mxu0 0
        %313 = vmatpush1.bf16.msra.mxu0 0
        %314 = vmatprep.subr.bf16.mxu0 0
        %315 = vmatpush1.bf16.msra.mxu0 0
        %316 = vmatprep.subr.bf16.mxu0 0
        %317 = vmatpush1.bf16.msra.mxu0 0
        %318 = vmatprep.subr.bf16.mxu0 0
        %319 = vmatpush1.bf16.msra.mxu0 0
        %320 = vmatprep.subr.bf16.mxu0 0
        %321 = vmatpush1.bf16.msra.mxu0 0
        %322 = vmatprep.subr.bf16.mxu0 0
        %323 = vmatpush1.bf16.msra.mxu0 0
        %324 = vmatprep.mubr.bf16.mxu0 0
        %325 = vmatmul.mubr.bf16.gmra.mrb[0].mxu0 %v223
        %v326 = vpop.f32.mrb[0].mxu0
        %v327 = vadd.f32 %v243, %v326
        %v328 = vpop.f32.mrb[0].mxu0
        %v329 = vpop.f32.mrb[0].mxu0
        %v330 = vpop.f32.mrb[0].mxu0
        %331 = vdwg.mxu0
        %v332 = vmax.f32 %v327, 0.0
        %v333 = vadd.f32 %v222, %v332
        %v334 = vpack.c.bf16 %v333, %v333
        %s335 = scalar_lea.vmem [#allocation2], 64
        %v336 = vld [vmem:[%s335] sm:$0xf]
        %v337 = vld [vmem:[%s335 + $0x4] sm:$0xf]
        %v338 = vld [vmem:[%s335 + $0x8] sm:$0xf]
        %v339 = vld [vmem:[%s335 + $0xc] sm:$0xf]
        %v340 = vld [vmem:[%s335 + $0x10] sm:$0xf]
        %v341 = vld [vmem:[%s335 + $0x14] sm:$0xf]
        %v342 = vld [vmem:[%s335 + $0x18] sm:$0xf]
        %v343 = vld [vmem:[%s335 + $0x1c] sm:$0xf]
        %v344 = vld [vmem:[%s335 + $0x20] sm:$0xf]
        %v345 = vld [vmem:[%s335 + $0x24] sm:$0xf]
        %v346 = vld [vmem:[%s335 + $0x28] sm:$0xf]
        %v347 = vld [vmem:[%s335 + $0x2c] sm:$0xf]
        %v348 = vld [vmem:[%s335 + $0x30] sm:$0xf]
        %v349 = vld [vmem:[%s335 + $0x34] sm:$0xf]
        %v350 = vld [vmem:[%s335 + $0x38] sm:$0xf]
        %v351 = vld [vmem:[%s335 + $0x3c] sm:$0xf]
        %v352 = vlaneseq
        %v353 = vshrl.u32 %v352, 7
        %v354 = vsub.s32 1, %v353
        %v355 = vrot.slane %v209, %v354
        %v372 = vunpack.c.l.b16 %v336
        %v373 = vunpack.c.l.b16 %v337
        %v374 = vunpack.c.l.b16 %v338
        %v375 = vunpack.c.l.b16 %v339
        %v376 = vunpack.c.l.b16 %v340
        %v377 = vunpack.c.l.b16 %v341
        %v378 = vunpack.c.l.b16 %v342
        %v379 = vunpack.c.l.b16 %v343
        %v380 = vunpack.c.l.b16 %v344
        %v381 = vunpack.c.l.b16 %v345
        %v382 = vunpack.c.l.b16 %v346
        %v383 = vunpack.c.l.b16 %v347
        %v384 = vunpack.c.l.b16 %v348
        %v385 = vunpack.c.l.b16 %v349
        %v386 = vunpack.c.l.b16 %v350
        %v387 = vunpack.c.l.b16 %v351
        %v388 = vpack.c.b16 %v373, %v372
        %v389 = vpack.c.b16 %v375, %v374
        %v390 = vpack.c.b16 %v377, %v376
        %v391 = vpack.c.b16 %v379, %v378
        %v392 = vpack.c.b16 %v381, %v380
        %v393 = vpack.c.b16 %v383, %v382
        %v394 = vpack.c.b16 %v385, %v384
        %v395 = vpack.c.b16 %v387, %v386
        %404 = vmatprep.subr.bf16.mxu0 0
        %405 = vmatpush1.bf16.msra.mxu0 %v388
        %406 = vmatprep.subr.bf16.mxu0 0
        %407 = vmatpush1.bf16.msra.mxu0 %v389
        %408 = vmatprep.subr.bf16.mxu0 0
        %409 = vmatpush1.bf16.msra.mxu0 %v390
        %410 = vmatprep.subr.bf16.mxu0 0
        %411 = vmatpush1.bf16.msra.mxu0 %v391
        %412 = vmatprep.subr.bf16.mxu0 0
        %413 = vmatpush1.bf16.msra.mxu0 %v392
        %414 = vmatprep.subr.bf16.mxu0 0
        %415 = vmatpush1.bf16.msra.mxu0 %v393
        %416 = vmatprep.subr.bf16.mxu0 0
        %417 = vmatpush1.bf16.msra.mxu0 %v394
        %418 = vmatprep.subr.bf16.mxu0 0
        %419 = vmatpush1.bf16.msra.mxu0 %v395
        %420 = vmatprep.subr.bf16.mxu0 0
        %421 = vmatpush1.bf16.msra.mxu0 0
        %422 = vmatprep.subr.bf16.mxu0 0
        %423 = vmatpush1.bf16.msra.mxu0 0
        %424 = vmatprep.subr.bf16.mxu0 0
        %425 = vmatpush1.bf16.msra.mxu0 0
        %426 = vmatprep.subr.bf16.mxu0 0
        %427 = vmatpush1.bf16.msra.mxu0 0
        %428 = vmatprep.subr.bf16.mxu0 0
        %429 = vmatpush1.bf16.msra.mxu0 0
        %430 = vmatprep.subr.bf16.mxu0 0
        %431 = vmatpush1.bf16.msra.mxu0 0
        %432 = vmatprep.subr.bf16.mxu0 0
        %433 = vmatpush1.bf16.msra.mxu0 0
        %434 = vmatprep.subr.bf16.mxu0 0
        %435 = vmatpush1.bf16.msra.mxu0 0
        %436 = vmatprep.mubr.bf16.mxu0 0
        %437 = vmatmul.mubr.bf16.gmra.mrb[0].mxu0 %v334
        %v438 = vpop.f32.mrb[0].mxu0
        %v439 = vadd.f32 %v355, %v438
        %v440 = vpop.f32.mrb[0].mxu0
        %v441 = vpop.f32.mrb[0].mxu0
        %v442 = vpop.f32.mrb[0].mxu0
        %443 = vdwg.mxu0
        %v444 = vmax.f32 %v439, 0.0
        %v445 = vpack.c.bf16 %v444, %v444
        %s446 = scalar_lea.vmem [#allocation2], 128
        %v447 = vld [vmem:[%s446] sm:$0xf]
        %v448 = vld [vmem:[%s446 + $0x4] sm:$0xf]
        %v449 = vld [vmem:[%s446 + $0x8] sm:$0xf]
        %v450 = vld [vmem:[%s446 + $0xc] sm:$0xf]
        %v451 = vld [vmem:[%s446 + $0x10] sm:$0xf]
        %v452 = vld [vmem:[%s446 + $0x14] sm:$0xf]
        %v453 = vld [vmem:[%s446 + $0x18] sm:$0xf]
        %v454 = vld [vmem:[%s446 + $0x1c] sm:$0xf]
        %v455 = vld [vmem:[%s446 + $0x20] sm:$0xf]
        %v456 = vld [vmem:[%s446 + $0x24] sm:$0xf]
        %v457 = vld [vmem:[%s446 + $0x28] sm:$0xf]
        %v458 = vld [vmem:[%s446 + $0x2c] sm:$0xf]
        %v459 = vld [vmem:[%s446 + $0x30] sm:$0xf]
        %v460 = vld [vmem:[%s446 + $0x34] sm:$0xf]
        %v461 = vld [vmem:[%s446 + $0x38] sm:$0xf]
        %v462 = vld [vmem:[%s446 + $0x3c] sm:$0xf]
        %v463 = vlaneseq
        %v464 = vshrl.u32 %v463, 7
        %v465 = vsub.s32 2, %v464
        %v466 = vrot.slane %v209, %v465
        %v483 = vunpack.c.l.b16 %v447
        %v484 = vunpack.c.l.b16 %v448
        %v485 = vunpack.c.l.b16 %v449
        %v486 = vunpack.c.l.b16 %v450
        %v487 = vunpack.c.l.b16 %v451
        %v488 = vunpack.c.l.b16 %v452
        %v489 = vunpack.c.l.b16 %v453
        %v490 = vunpack.c.l.b16 %v454
        %v491 = vunpack.c.l.b16 %v455
        %v492 = vunpack.c.l.b16 %v456
        %v493 = vunpack.c.l.b16 %v457
        %v494 = vunpack.c.l.b16 %v458
        %v495 = vunpack.c.l.b16 %v459
        %v496 = vunpack.c.l.b16 %v460
        %v497 = vunpack.c.l.b16 %v461
        %v498 = vunpack.c.l.b16 %v462
        %v499 = vpack.c.b16 %v484, %v483
        %v500 = vpack.c.b16 %v486, %v485
        %v501 = vpack.c.b16 %v488, %v487
        %v502 = vpack.c.b16 %v490, %v489
        %v503 = vpack.c.b16 %v492, %v491
        %v504 = vpack.c.b16 %v494, %v493
        %v505 = vpack.c.b16 %v496, %v495
        %v506 = vpack.c.b16 %v498, %v497
        %515 = vmatprep.subr.bf16.mxu0 0
        %516 = vmatpush1.bf16.msra.mxu0 %v499
        %517 = vmatprep.subr.bf16.mxu0 0
        %518 = vmatpush1.bf16.msra.mxu0 %v500
        %519 = vmatprep.subr.bf16.mxu0 0
        %520 = vmatpush1.bf16.msra.mxu0 %v501
        %521 = vmatprep.subr.bf16.mxu0 0
        %522 = vmatpush1.bf16.msra.mxu0 %v502
        %523 = vmatprep.subr.bf16.mxu0 0
        %524 = vmatpush1.bf16.msra.mxu0 %v503
        %525 = vmatprep.subr.bf16.mxu0 0
        %526 = vmatpush1.bf16.msra.mxu0 %v504
        %527 = vmatprep.subr.bf16.mxu0 0
        %528 = vmatpush1.bf16.msra.mxu0 %v505
        %529 = vmatprep.subr.bf16.mxu0 0
        %530 = vmatpush1.bf16.msra.mxu0 %v506
        %531 = vmatprep.subr.bf16.mxu0 0
        %532 = vmatpush1.bf16.msra.mxu0 0
        %533 = vmatprep.subr.bf16.mxu0 0
        %534 = vmatpush1.bf16.msra.mxu0 0
        %535 = vmatprep.subr.bf16.mxu0 0
        %536 = vmatpush1.bf16.msra.mxu0 0
        %537 = vmatprep.subr.bf16.mxu0 0
        %538 = vmatpush1.bf16.msra.mxu0 0
        %539 = vmatprep.subr.bf16.mxu0 0
        %540 = vmatpush1.bf16.msra.mxu0 0
        %541 = vmatprep.subr.bf16.mxu0 0
        %542 = vmatpush1.bf16.msra.mxu0 0
        %543 = vmatprep.subr.bf16.mxu0 0
        %544 = vmatpush1.bf16.msra.mxu0 0
        %545 = vmatprep.subr.bf16.mxu0 0
        %546 = vmatpush1.bf16.msra.mxu0 0
        %547 = vmatprep.mubr.bf16.mxu0 0
        %548 = vmatmul.mubr.bf16.gmra.mrb[0].mxu0 %v445
        %v549 = vpop.f32.mrb[0].mxu0
        %v550 = vadd.f32 %v466, %v549
        %v551 = vpop.f32.mrb[0].mxu0
        %v552 = vpop.f32.mrb[0].mxu0
        %v553 = vpop.f32.mrb[0].mxu0
        %554 = vdwg.mxu0
        %v555 = vadd.f32 %v439, %v550
        %v556 = vmax.f32 %v555, 0.0
        %v557 = vpack.c.bf16 %v556, %v556
        %s558 = scalar_lea.vmem [#allocation2], 192
        %v559 = vld [vmem:[%s558] sm:$0xf]
        %v560 = vld [vmem:[%s558 + $0x4] sm:$0xf]
        %v561 = vld [vmem:[%s558 + $0x8] sm:$0xf]
        %v562 = vld [vmem:[%s558 + $0xc] sm:$0xf]
        %v563 = vld [vmem:[%s558 + $0x10] sm:$0xf]
        %v564 = vld [vmem:[%s558 + $0x14] sm:$0xf]
        %v565 = vld [vmem:[%s558 + $0x18] sm:$0xf]
        %v566 = vld [vmem:[%s558 + $0x1c] sm:$0xf]
        %v567 = vld [vmem:[%s558 + $0x20] sm:$0xf]
        %v568 = vld [vmem:[%s558 + $0x24] sm:$0xf]
        %v569 = vld [vmem:[%s558 + $0x28] sm:$0xf]
        %v570 = vld [vmem:[%s558 + $0x2c] sm:$0xf]
        %v571 = vld [vmem:[%s558 + $0x30] sm:$0xf]
        %v572 = vld [vmem:[%s558 + $0x34] sm:$0xf]
        %v573 = vld [vmem:[%s558 + $0x38] sm:$0xf]
        %v574 = vld [vmem:[%s558 + $0x3c] sm:$0xf]
        %v575 = vlaneseq
        %v576 = vshrl.u32 %v575, 7
        %v577 = vsub.s32 3, %v576
        %v578 = vrot.slane %v209, %v577
        %v595 = vunpack.c.l.b16 %v559
        %v596 = vunpack.c.l.b16 %v560
        %v597 = vunpack.c.l.b16 %v561
        %v598 = vunpack.c.l.b16 %v562
        %v599 = vunpack.c.l.b16 %v563
        %v600 = vunpack.c.l.b16 %v564
        %v601 = vunpack.c.l.b16 %v565
        %v602 = vunpack.c.l.b16 %v566
        %v603 = vunpack.c.l.b16 %v567
        %v604 = vunpack.c.l.b16 %v568
        %v605 = vunpack.c.l.b16 %v569
        %v606 = vunpack.c.l.b16 %v570
        %v607 = vunpack.c.l.b16 %v571
        %v608 = vunpack.c.l.b16 %v572
        %v609 = vunpack.c.l.b16 %v573
        %v610 = vunpack.c.l.b16 %v574
        %v611 = vpack.c.b16 %v596, %v595
        %v612 = vpack.c.b16 %v598, %v597
        %v613 = vpack.c.b16 %v600, %v599
        %v614 = vpack.c.b16 %v602, %v601
        %v615 = vpack.c.b16 %v604, %v603
        %v616 = vpack.c.b16 %v606, %v605
        %v617 = vpack.c.b16 %v608, %v607
        %v618 = vpack.c.b16 %v610, %v609
        %627 = vmatprep.subr.bf16.mxu0 0
        %628 = vmatpush1.bf16.msra.mxu0 %v611
        %629 = vmatprep.subr.bf16.mxu0 0
        %630 = vmatpush1.bf16.msra.mxu0 %v612
        %631 = vmatprep.subr.bf16.mxu0 0
        %632 = vmatpush1.bf16.msra.mxu0 %v613
        %633 = vmatprep.subr.bf16.mxu0 0
        %634 = vmatpush1.bf16.msra.mxu0 %v614
        %635 = vmatprep.subr.bf16.mxu0 0
        %636 = vmatpush1.bf16.msra.mxu0 %v615
        %637 = vmatprep.subr.bf16.mxu0 0
        %638 = vmatpush1.bf16.msra.mxu0 %v616
        %639 = vmatprep.subr.bf16.mxu0 0
        %640 = vmatpush1.bf16.msra.mxu0 %v617
        %641 = vmatprep.subr.bf16.mxu0 0
        %642 = vmatpush1.bf16.msra.mxu0 %v618
        %643 = vmatprep.subr.bf16.mxu0 0
        %644 = vmatpush1.bf16.msra.mxu0 0
        %645 = vmatprep.subr.bf16.mxu0 0
        %646 = vmatpush1.bf16.msra.mxu0 0
        %647 = vmatprep.subr.bf16.mxu0 0
        %648 = vmatpush1.bf16.msra.mxu0 0
        %649 = vmatprep.subr.bf16.mxu0 0
        %650 = vmatpush1.bf16.msra.mxu0 0
        %651 = vmatprep.subr.bf16.mxu0 0
        %652 = vmatpush1.bf16.msra.mxu0 0
        %653 = vmatprep.subr.bf16.mxu0 0
        %654 = vmatpush1.bf16.msra.mxu0 0
        %655 = vmatprep.subr.bf16.mxu0 0
        %656 = vmatpush1.bf16.msra.mxu0 0
        %657 = vmatprep.subr.bf16.mxu0 0
        %658 = vmatpush1.bf16.msra.mxu0 0
        %659 = vmatprep.mubr.bf16.mxu0 0
        %660 = vmatmul.mubr.bf16.gmra.mrb[0].mxu0 %v557
        %v661 = vpop.f32.mrb[0].mxu0
        %v662 = vadd.f32 %v578, %v661
        %v663 = vpop.f32.mrb[0].mxu0
        %v664 = vpop.f32.mrb[0].mxu0
        %v665 = vpop.f32.mrb[0].mxu0
        %666 = vdwg.mxu0
        %v667 = vmax.f32 %v662, 0.0
        %v668 = vadd.f32 %v556, %v667
        %v669 = vpack.c.bf16 %v668, %v668
        %s670 = scalar_lea.vmem [#allocation2], 256
        %v671 = vld [vmem:[%s670] sm:$0xf]
        %v672 = vld [vmem:[%s670 + $0x4] sm:$0xf]
        %v673 = vld [vmem:[%s670 + $0x8] sm:$0xf]
        %v674 = vld [vmem:[%s670 + $0xc] sm:$0xf]
        %v675 = vld [vmem:[%s670 + $0x10] sm:$0xf]
        %v676 = vld [vmem:[%s670 + $0x14] sm:$0xf]
        %v677 = vld [vmem:[%s670 + $0x18] sm:$0xf]
        %v678 = vld [vmem:[%s670 + $0x1c] sm:$0xf]
        %v679 = vld [vmem:[%s670 + $0x20] sm:$0xf]
        %v680 = vld [vmem:[%s670 + $0x24] sm:$0xf]
        %v681 = vld [vmem:[%s670 + $0x28] sm:$0xf]
        %v682 = vld [vmem:[%s670 + $0x2c] sm:$0xf]
        %v683 = vld [vmem:[%s670 + $0x30] sm:$0xf]
        %v684 = vld [vmem:[%s670 + $0x34] sm:$0xf]
        %v685 = vld [vmem:[%s670 + $0x38] sm:$0xf]
        %v686 = vld [vmem:[%s670 + $0x3c] sm:$0xf]
        %v687 = vlaneseq
        %v688 = vshrl.u32 %v687, 7
        %v689 = vsub.s32 4, %v688
        %v690 = vrot.slane %v209, %v689
        %v707 = vunpack.c.l.b16 %v671
        %v708 = vunpack.c.l.b16 %v672
        %v709 = vunpack.c.l.b16 %v673
        %v710 = vunpack.c.l.b16 %v674
        %v711 = vunpack.c.l.b16 %v675
        %v712 = vunpack.c.l.b16 %v676
        %v713 = vunpack.c.l.b16 %v677
        %v714 = vunpack.c.l.b16 %v678
        %v715 = vunpack.c.l.b16 %v679
        %v716 = vunpack.c.l.b16 %v680
        %v717 = vunpack.c.l.b16 %v681
        %v718 = vunpack.c.l.b16 %v682
        %v719 = vunpack.c.l.b16 %v683
        %v720 = vunpack.c.l.b16 %v684
        %v721 = vunpack.c.l.b16 %v685
        %v722 = vunpack.c.l.b16 %v686
        %v723 = vpack.c.b16 %v708, %v707
        %v724 = vpack.c.b16 %v710, %v709
        %v725 = vpack.c.b16 %v712, %v711
        %v726 = vpack.c.b16 %v714, %v713
        %v727 = vpack.c.b16 %v716, %v715
        %v728 = vpack.c.b16 %v718, %v717
        %v729 = vpack.c.b16 %v720, %v719
        %v730 = vpack.c.b16 %v722, %v721
        %739 = vmatprep.subr.bf16.mxu0 0
        %740 = vmatpush1.bf16.msra.mxu0 %v723
        %741 = vmatprep.subr.bf16.mxu0 0
        %742 = vmatpush1.bf16.msra.mxu0 %v724
        %743 = vmatprep.subr.bf16.mxu0 0
        %744 = vmatpush1.bf16.msra.mxu0 %v725
        %745 = vmatprep.subr.bf16.mxu0 0
        %746 = vmatpush1.bf16.msra.mxu0 %v726
        %747 = vmatprep.subr.bf16.mxu0 0
        %748 = vmatpush1.bf16.msra.mxu0 %v727
        %749 = vmatprep.subr.bf16.mxu0 0
        %750 = vmatpush1.bf16.msra.mxu0 %v728
        %751 = vmatprep.subr.bf16.mxu0 0
        %752 = vmatpush1.bf16.msra.mxu0 %v729
        %753 = vmatprep.subr.bf16.mxu0 0
        %754 = vmatpush1.bf16.msra.mxu0 %v730
        %755 = vmatprep.subr.bf16.mxu0 0
        %756 = vmatpush1.bf16.msra.mxu0 0
        %757 = vmatprep.subr.bf16.mxu0 0
        %758 = vmatpush1.bf16.msra.mxu0 0
        %759 = vmatprep.subr.bf16.mxu0 0
        %760 = vmatpush1.bf16.msra.mxu0 0
        %761 = vmatprep.subr.bf16.mxu0 0
        %762 = vmatpush1.bf16.msra.mxu0 0
        %763 = vmatprep.subr.bf16.mxu0 0
        %764 = vmatpush1.bf16.msra.mxu0 0
        %765 = vmatprep.subr.bf16.mxu0 0
        %766 = vmatpush1.bf16.msra.mxu0 0
        %767 = vmatprep.subr.bf16.mxu0 0
        %768 = vmatpush1.bf16.msra.mxu0 0
        %769 = vmatprep.subr.bf16.mxu0 0
        %770 = vmatpush1.bf16.msra.mxu0 0
        %771 = vmatprep.mubr.bf16.mxu0 0
        %772 = vmatmul.mubr.bf16.gmra.mrb[0].mxu0 %v669
        %v773 = vpop.f32.mrb[0].mxu0
        %v774 = vadd.f32 %v690, %v773
        %v775 = vpop.f32.mrb[0].mxu0
        %v776 = vpop.f32.mrb[0].mxu0
        %v777 = vpop.f32.mrb[0].mxu0
        %778 = vdwg.mxu0
        %v779 = vxor.u32 %v774, 2147483648
        %v780 = vmul.f32 %v779, 1.442695
        %v781 = vpow.pop %v780
        %v782 = vadd.f32 %v781, 1.0
        %v783 = vrcp.pop %v782
        %v784 = vmul.f32 1.0, %v783
        %v785 = vpack.c.bf16 %v784, %v784
        %s786 = scalar_lea.vmem [#allocation2], 320
        %v787 = vld [vmem:[%s786] sm:$0xf]
        %v788 = vld [vmem:[%s786 + $0x4] sm:$0xf]
        %v789 = vld [vmem:[%s786 + $0x8] sm:$0xf]
        %v790 = vld [vmem:[%s786 + $0xc] sm:$0xf]
        %v791 = vld [vmem:[%s786 + $0x10] sm:$0xf]
        %v792 = vld [vmem:[%s786 + $0x14] sm:$0xf]
        %v793 = vld [vmem:[%s786 + $0x18] sm:$0xf]
        %v794 = vld [vmem:[%s786 + $0x1c] sm:$0xf]
        %v795 = vld [vmem:[%s786 + $0x20] sm:$0xf]
        %v796 = vld [vmem:[%s786 + $0x24] sm:$0xf]
        %v797 = vld [vmem:[%s786 + $0x28] sm:$0xf]
        %v798 = vld [vmem:[%s786 + $0x2c] sm:$0xf]
        %v799 = vld [vmem:[%s786 + $0x30] sm:$0xf]
        %v800 = vld [vmem:[%s786 + $0x34] sm:$0xf]
        %v801 = vld [vmem:[%s786 + $0x38] sm:$0xf]
        %v802 = vld [vmem:[%s786 + $0x3c] sm:$0xf]
        %v803 = vlaneseq
        %v804 = vshrl.u32 %v803, 7
        %v805 = vsub.s32 5, %v804
        %v806 = vrot.slane %v209, %v805
        %v823 = vunpack.c.l.b16 %v787
        %v824 = vunpack.c.l.b16 %v788
        %v825 = vunpack.c.l.b16 %v789
        %v826 = vunpack.c.l.b16 %v790
        %v827 = vunpack.c.l.b16 %v791
        %v828 = vunpack.c.l.b16 %v792
        %v829 = vunpack.c.l.b16 %v793
        %v830 = vunpack.c.l.b16 %v794
        %v831 = vunpack.c.l.b16 %v795
        %v832 = vunpack.c.l.b16 %v796
        %v833 = vunpack.c.l.b16 %v797
        %v834 = vunpack.c.l.b16 %v798
        %v835 = vunpack.c.l.b16 %v799
        %v836 = vunpack.c.l.b16 %v800
        %v837 = vunpack.c.l.b16 %v801
        %v838 = vunpack.c.l.b16 %v802
        %v839 = vpack.c.b16 %v824, %v823
        %v840 = vpack.c.b16 %v826, %v825
        %v841 = vpack.c.b16 %v828, %v827
        %v842 = vpack.c.b16 %v830, %v829
        %v843 = vpack.c.b16 %v832, %v831
        %v844 = vpack.c.b16 %v834, %v833
        %v845 = vpack.c.b16 %v836, %v835
        %v846 = vpack.c.b16 %v838, %v837
        %855 = vmatprep.subr.bf16.mxu0 0
        %856 = vmatpush1.bf16.msra.mxu0 %v839
        %857 = vmatprep.subr.bf16.mxu0 0
        %858 = vmatpush1.bf16.msra.mxu0 %v840
        %859 = vmatprep.subr.bf16.mxu0 0
        %860 = vmatpush1.bf16.msra.mxu0 %v841
        %861 = vmatprep.subr.bf16.mxu0 0
        %862 = vmatpush1.bf16.msra.mxu0 %v842
        %863 = vmatprep.subr.bf16.mxu0 0
        %864 = vmatpush1.bf16.msra.mxu0 %v843
        %865 = vmatprep.subr.bf16.mxu0 0
        %866 = vmatpush1.bf16.msra.mxu0 %v844
        %867 = vmatprep.subr.bf16.mxu0 0
        %868 = vmatpush1.bf16.msra.mxu0 %v845
        %869 = vmatprep.subr.bf16.mxu0 0
        %870 = vmatpush1.bf16.msra.mxu0 %v846
        %871 = vmatprep.subr.bf16.mxu0 0
        %872 = vmatpush1.bf16.msra.mxu0 0
        %873 = vmatprep.subr.bf16.mxu0 0
        %874 = vmatpush1.bf16.msra.mxu0 0
        %875 = vmatprep.subr.bf16.mxu0 0
        %876 = vmatpush1.bf16.msra.mxu0 0
        %877 = vmatprep.subr.bf16.mxu0 0
        %878 = vmatpush1.bf16.msra.mxu0 0
        %879 = vmatprep.subr.bf16.mxu0 0
        %880 = vmatpush1.bf16.msra.mxu0 0
        %881 = vmatprep.subr.bf16.mxu0 0
        %882 = vmatpush1.bf16.msra.mxu0 0
        %883 = vmatprep.subr.bf16.mxu0 0
        %884 = vmatpush1.bf16.msra.mxu0 0
        %885 = vmatprep.subr.bf16.mxu0 0
        %886 = vmatpush1.bf16.msra.mxu0 0
        %887 = vmatprep.mubr.bf16.mxu0 0
        %888 = vmatmul.mubr.bf16.gmra.mrb[0].mxu0 %v785
        %v889 = vpop.f32.mrb[0].mxu0
        %v890 = vadd.f32 %v806, %v889
        %v891 = vpop.f32.mrb[0].mxu0
        %v892 = vpop.f32.mrb[0].mxu0
        %v893 = vpop.f32.mrb[0].mxu0
        %894 = vdwg.mxu0
        %v895 = vpack.c.bf16 %v890, %v890
        %896 = vst [vmem:[%s207] sm:$0xf] %v895
        %p897 = scmp.lt.s32.totalorder %s16, 1
        %s898 = scalar_select %p897, %s16, 1
        %s899 = smul.addr %s898, 4
        %s900 = scalar_lea.vmem %s4, %s899
        // Predicated region
        $region41: #{linear_regression_forward.1} parent=35 // pred_check
          %p901 = pneg %p123
        $region42: #{linear_regression_forward.1} parent=35 // pred_check_branch
          %903 = sbr.rel (%p901) target = $region44
        $region43: #{linear_regression_forward.1} parent=35 // pred_region
          _
        $region44: #{linear_regression_forward.1} parent=35 // pred_fallthru
          _
      $region36: #{linear_regression_forward.1} parent=5 // pred_fallthru
        _
      %p904 = scmp.le.s32.totalorder 2, %s11
      // Predicated region
      $region45: #{linear_regression_forward.1} parent=5 // pred_check
        %p905 = pneg %p904
      $region46: #{linear_regression_forward.1} parent=5 // pred_check_branch
        %907 = sbr.rel (%p905) target = $region48
      $region47: #{linear_regression_forward.1} parent=5 // pred_region
        %s908 = ssub.s32 %s11, 2
        // Predicated region
        $region49: #{linear_regression_forward.1} parent=47 // pred_check
          %p909 = pneg %p129
        $region50: #{linear_regression_forward.1} parent=47 // pred_check_branch
          %911 = sbr.rel (%p909) target = $region52
        $region51: #{linear_regression_forward.1} parent=47 // pred_region
          %p912 = scmp.lt.s32.totalorder %s17, 1
          %s913 = scalar_select %p912, %s17, 1
          %s914 = smul.addr %s913, 4
          %s915 = scalar_lea.vmem %s4, %s914
        $region52: #{linear_regression_forward.1} parent=47 // pred_fallthru
          _
      $region48: #{linear_regression_forward.1} parent=5 // pred_fallthru
        _
    $region6: #{linear_regression_forward.1} parent=1 // loop_footer
      %s15 = sadd.s32 1, %s11
    $region7: #{linear_regression_forward.1} parent=1 // loop_footer_branch
      %10 = sbr.rel target = $region3
    $region8: #{linear_regression_forward.1} parent=1 // loop_exit
      _
    %916 = vsyncpa [#allocation3], 1
    %s917 = scalar_lea.sflag [#allocation3], 1
    %918 = vsyncpa %s917, 1

</llo_original>
